<compile_context>
chip_gen: v6e
topology: v6e:2x2x1
jax: 0.10.0
libtpu: 0.0.40
codegen_flags: <defaults>
</compile_context>

<pallas_src>
import functools
import math

import jax
import jax.numpy as jnp
from jax.experimental import pallas as pl
from jax.experimental.pallas import tpu as pltpu

_LANES = 128
_ROW_TILE_CAP = 2048          # rows per block -> (2048, 128) f32 = 1 MiB blocks
_VMEM_LIMIT = 32 * 1024 * 1024  # explicit scoped-VMEM limit, safe on v5e/v6e/v7x


def _rope_kernel(cos_ref, sin_ref, q_ref, k_ref, qo_ref, ko_ref, *, half):
    """Folded-layout RoPE on (TR, 128) blocks.

    cos_ref / sin_ref : (TR, 128) f32 tables; sin is pre-signed
                        (-sin on the low half of each head_dim chunk).
    q/k/qo/ko         : (TR, 128) data blocks in the same folded layout.
    """
    cos = cos_ref[...]
    sin = sin_ref[...]
    # Lane offset within each head_dim chunk; True on the low half.
    lane = jax.lax.broadcasted_iota(jnp.int32, cos.shape, 1)
    in_lo = (lane % (2 * half)) < half

    def apply(x_ref, o_ref):
        x = x_ref[...].astype(jnp.float32)
        # rotate_half partner lanes via whole-row lane rolls.  Because every
        # head_dim chunk is lane-aligned inside the 128-lane row, the selected
        # partner never crosses a chunk boundary.
        x_from_hi = jnp.roll(x, -half, axis=1)   # lane i -> x[i + half]
        x_from_lo = jnp.roll(x, half, axis=1)    # lane i -> x[i - half]
        partner = jnp.where(in_lo, x_from_hi, x_from_lo)
        o_ref[...] = (x * cos + partner * sin).astype(o_ref.dtype)

    apply(q_ref, qo_ref)
    apply(k_ref, ko_ref)


def _sublane_multiple(dtype):
    """Sublane packing multiple: 8 for f32, 16 for bf16, 32 for int8/fp8."""
    return 8 * max(1, 4 // jnp.dtype(dtype).itemsize)


def _pick_fold_tile(total_rows, period, sub, cap):
    """Row tile for the flattened (B*rows, 128) layout.

    Must be a multiple of `period` (= rows per batch, so the pre-tiled table
    lines up with every block) and of `sub` (sublane packing), unless it is the
    full extent.  Returns None if no such tile <= cap exists.
    """
    if total_rows <= cap:
        return total_rows                    # full extent: always legal
    step = math.lcm(period, sub)
    if step <= cap:
        return (cap // step) * step
    return None                              # fall back to the 2-D path


@functools.partial(jax.jit, static_argnames=("head_dim", "base"))
def rotary_embedding(q, k, *, head_dim=32, base=10000):
    """Pallas TPU implementation of RotaryEmbedding.forward(q, k)."""
    B, S, D = q.shape
    assert k.shape == q.shape
    assert D == head_dim
    assert head_dim % 2 == 0
    # TODO(synk): head dims that do not divide 128 (e.g. 256) would need an
    # unfolded (D-wide lane) code path; all common RoPE head dims divide 128.
    assert _LANES % head_dim == 0, "head_dim must divide 128 for lane folding"

    group = _LANES // head_dim               # positions folded into one row
    pad = (-S) % group
    s_pad = S + pad
    if pad:
        # TODO(synk): the pad/slice copies could be avoided by handling the
        # <= group-1 position tail separately; the aligned case pays nothing.
        q = jnp.pad(q, ((0, 0), (0, pad), (0, 0)))
        k = jnp.pad(k, ((0, 0), (0, pad), (0, 0)))
    rows = s_pad // group

    # cos / pre-signed-sin tables: half-width transcendentals, computed once in
    # the wrapper (f32), rotate_half's sign baked in, laid out in the folded
    # (rows, 128) layout.
    half = head_dim // 2
    inv_freq = 1.0 / (
        base ** (jnp.arange(0, head_dim, 2, dtype=jnp.float32) / head_dim)
    )
    t = jnp.arange(s_pad, dtype=jnp.float32)
    freqs = t[:, None] * inv_freq[None, :]                    # (s_pad, D/2)
    cos_h = jnp.cos(freqs)
    sin_h = jnp.sin(freqs)
    cos = jnp.concatenate([cos_h, cos_h], axis=-1).reshape(rows, _LANES)
    sin_signed = jnp.concatenate([-sin_h, sin_h], axis=-1).reshape(rows, _LANES)

    sub = _sublane_multiple(q.dtype)
    kern = functools.partial(_rope_kernel, half=half)
    cparams = lambda sem: pltpu.CompilerParams(
        dimension_semantics=sem, vmem_limit_bytes=_VMEM_LIMIT)

    total_rows = B * rows
    tr_fold = _pick_fold_tile(total_rows, rows, sub, _ROW_TILE_CAP)

    if tr_fold is not None:
        # ---- Folded path: batch folded into the row axis (decode-friendly).
        q_f = q.reshape(total_rows, _LANES)                   # free reshape
        k_f = k.reshape(total_rows, _LANES)
        reps = tr_fold // rows
        cos_t = jnp.tile(cos, (reps, 1)) if reps > 1 else cos
        sin_t = jnp.tile(sin_signed, (reps, 1)) if reps > 1 else sin_signed
        grid = (pl.cdiv(total_rows, tr_fold),)
        table_spec = pl.BlockSpec((tr_fold, _LANES), lambda i: (0, 0))
        data_spec = pl.BlockSpec((tr_fold, _LANES), lambda i: (i, 0))
        q_out, k_out = pl.pallas_call(
            kern,
            out_shape=(
                jax.ShapeDtypeStruct((total_rows, _LANES), q.dtype),
                jax.ShapeDtypeStruct((total_rows, _LANES), k.dtype),
            ),
            grid=grid,
            in_specs=[table_spec, table_spec, data_spec, data_spec],
            out_specs=(data_spec, data_spec),
            compiler_params=cparams(("parallel",)),
        )(cos_t, sin_t, q_f, k_f)
    else:
        # ---- Long-sequence path: 2-D grid (row tiles, batch), both parallel,
        # batch innermost so the table block DMA is skipped across batch.
        tr = min(rows, (_ROW_TILE_CAP // sub) * sub)
        q_f = q.reshape(B, rows, _LANES)
        k_f = k.reshape(B, rows, _LANES)
        grid = (pl.cdiv(rows, tr), B)
        table_spec = pl.BlockSpec((tr, _LANES), lambda r, b: (r, 0))
        data_spec = pl.BlockSpec((None, tr, _LANES), lambda r, b: (b, r, 0))
        q_out, k_out = pl.pallas_call(
            kern,
            out_shape=(
                jax.ShapeDtypeStruct((B, rows, _LANES), q.dtype),
                jax.ShapeDtypeStruct((B, rows, _LANES), k.dtype),
            ),
            grid=grid,
            in_specs=[table_spec, table_spec, data_spec, data_spec],
            out_specs=(data_spec, data_spec),
            compiler_params=cparams(("parallel", "parallel")),
        )(cos, sin_signed, q_f, k_f)

    q_out = q_out.reshape(B, s_pad, D)
    k_out = k_out.reshape(B, s_pad, D)
    if pad:
        q_out = q_out[:, :S]
        k_out = k_out[:, :S]
    return q_out, k_out


def _reference(q, k, head_dim=32, base=10000):
    """Pure-JAX reference matching the PyTorch module."""
    B, S, D = q.shape
    inv_freq = 1.0 / (
        base ** (jnp.arange(0, head_dim, 2, dtype=jnp.float32) / head_dim)
    )
    t = jnp.arange(S, dtype=jnp.float32)
    freqs = jnp.einsum("i,j->ij", t, inv_freq)
    emb = jnp.concatenate([freqs, freqs], axis=-1)
    cos = jnp.cos(emb)[None].astype(q.dtype)
    sin = jnp.sin(emb)[None].astype(q.dtype)

    def rotate_half(x):
        x1, x2 = x[..., : D // 2], x[..., D // 2 :]
        return jnp.concatenate([-x2, x1], axis=-1)

    return q * cos + rotate_half(q) * sin, k * cos + rotate_half(k) * sin


if __name__ == "__main__":
    head_dim = 32
    batch, seq_len = 2, 8

    key = jax.random.PRNGKey(0)
    kq, kk = jax.random.split(key)
    q = jax.random.normal(kq, (batch, seq_len, head_dim), dtype=jnp.float32)
    k = jax.random.normal(kk, (batch, seq_len, head_dim), dtype=jnp.float32)

    # Aligned sequence length (no padding path).
    q_out, k_out = rotary_embedding(q, k, head_dim=head_dim)
    jax.block_until_ready((q_out, k_out))
    q_ref, k_ref = _reference(q, k, head_dim=head_dim)
    assert q_out.shape == q.shape and k_out.shape == k.shape
    assert jnp.allclose(q_out, q_ref, atol=1e-5, rtol=1e-5)
    assert jnp.allclose(k_out, k_ref, atol=1e-5, rtol=1e-5)

    # Unaligned sequence length (exercises the tail-padding path).
    q_u, k_u = q[:, :7], k[:, :7]
    q_out_u, k_out_u = rotary_embedding(q_u, k_u, head_dim=head_dim)
    jax.block_until_ready((q_out_u, k_out_u))
    q_ref_u, k_ref_u = _reference(q_u, k_u, head_dim=head_dim)
    assert q_out_u.shape == q_u.shape and k_out_u.shape == k_u.shape
    assert jnp.allclose(q_out_u, q_ref_u, atol=1e-5, rtol=1e-5)
    assert jnp.allclose(k_out_u, k_ref_u, atol=1e-5, rtol=1e-5)

    print("KERNEL_OK")
</pallas_src>

<mosaic_0001>
module attributes {stable_mosaic.version = 11 : i64} {
  func.func @_rope_kernel(%arg0: i32, %arg1: memref<4x128xf32, #tpu.memory_space<vmem>>, %arg2: memref<4x128xf32, #tpu.memory_space<vmem>>, %arg3: memref<4x128xf32, #tpu.memory_space<vmem>>, %arg4: memref<4x128xf32, #tpu.memory_space<vmem>>, %arg5: memref<4x128xf32, #tpu.memory_space<vmem>>, %arg6: memref<4x128xf32, #tpu.memory_space<vmem>>) attributes {dimension_semantics = [#tpu.dimension_semantics<parallel>], iteration_bounds = array<i64: 1>, scalar_prefetch = 0 : i64, scratch_operands = 0 : i64, tpu.core_type = #tpu.core_type<tc>, window_params = [{pipeline_mode = #tpu.pipeline_mode<synchronous>, transform_indices = @transform_0, window_bounds = array<i64: 4, 128>}, {pipeline_mode = #tpu.pipeline_mode<synchronous>, transform_indices = @transform_1, window_bounds = array<i64: 4, 128>}, {transform_indices = @transform_2, window_bounds = array<i64: 4, 128>}, {transform_indices = @transform_3, window_bounds = array<i64: 4, 128>}, {transform_indices = @transform_4, window_bounds = array<i64: 4, 128>}, {transform_indices = @transform_5, window_bounds = array<i64: 4, 128>}]} {
    %c0 = arith.constant 0 : index
    %c0_0 = arith.constant 0 : index
    %0 = vector.load %arg1[%c0, %c0_0] : memref<4x128xf32, #tpu.memory_space<vmem>>, vector<4x128xf32>
    %c0_1 = arith.constant 0 : index
    %c0_2 = arith.constant 0 : index
    %1 = vector.load %arg2[%c0_1, %c0_2] : memref<4x128xf32, #tpu.memory_space<vmem>>, vector<4x128xf32>
    %2 = tpu.iota {dimensions = array<i32: 1>} : vector<4x128xi32>
    %c32_i32 = arith.constant 32 : i32
    %c0_i32 = arith.constant 0 : i32
    %3 = arith.cmpi eq, %c32_i32, %c0_i32 : i32
    %c1_i32 = arith.constant 1 : i32
    %4 = arith.select %3, %c1_i32, %c32_i32 : i32
    %5 = vector.broadcast %4 : i32 to vector<4x128xi32>
    %6 = arith.remsi %2, %5 : vector<4x128xi32>
    %c0_i32_3 = arith.constant 0 : i32
    %7 = vector.broadcast %c0_i32_3 : i32 to vector<4x128xi32>
    %8 = arith.cmpi ne, %6, %7 : vector<4x128xi32>
    %c0_i32_4 = arith.constant 0 : i32
    %9 = vector.broadcast %c0_i32_4 : i32 to vector<4x128xi32>
    %10 = arith.cmpi slt, %6, %9 : vector<4x128xi32>
    %c0_i32_5 = arith.constant 0 : i32
    %11 = arith.cmpi slt, %4, %c0_i32_5 : i32
    %12 = vector.broadcast %11 : i1 to vector<4x128xi1>
    %13 = vector.broadcast %12 : vector<4x128xi1> to vector<4x128xi1>
    %14 = arith.xori %10, %13 : vector<4x128xi1>
    %15 = arith.andi %14, %8 : vector<4x128xi1>
    %16 = vector.broadcast %4 : i32 to vector<4x128xi32>
    %17 = arith.addi %6, %16 : vector<4x128xi32>
    %18 = arith.select %15, %17, %6 : vector<4x128xi1>, vector<4x128xi32>
    %c16_i32 = arith.constant 16 : i32
    %19 = vector.broadcast %c16_i32 : i32 to vector<4x128xi32>
    %20 = arith.cmpi slt, %18, %19 : vector<4x128xi32>
    %c0_6 = arith.constant 0 : index
    %c0_7 = arith.constant 0 : index
    %21 = vector.load %arg3[%c0_6, %c0_7] : memref<4x128xf32, #tpu.memory_space<vmem>>, vector<4x128xf32>
    %22 = vector.extract_strided_slice %21 {offsets = [0, 16], sizes = [4, 112], strides = [1, 1]} : vector<4x128xf32> to vector<4x112xf32>
    %23 = vector.extract_strided_slice %21 {offsets = [0, 0], sizes = [4, 16], strides = [1, 1]} : vector<4x128xf32> to vector<4x16xf32>
    %24 = tpu.concatenate %22, %23 in 1 : vector<4x112xf32>, vector<4x16xf32> -> vector<4x128xf32>
    %25 = vector.extract_strided_slice %21 {offsets = [0, 112], sizes = [4, 16], strides = [1, 1]} : vector<4x128xf32> to vector<4x16xf32>
    %26 = vector.extract_strided_slice %21 {offsets = [0, 0], sizes = [4, 112], strides = [1, 1]} : vector<4x128xf32> to vector<4x112xf32>
    %27 = tpu.concatenate %25, %26 in 1 : vector<4x16xf32>, vector<4x112xf32> -> vector<4x128xf32>
    %28 = arith.select %20, %24, %27 : vector<4x128xi1>, vector<4x128xf32>
    %29 = arith.mulf %21, %0 : vector<4x128xf32>
    %30 = arith.mulf %28, %1 : vector<4x128xf32>
    %31 = arith.addf %29, %30 : vector<4x128xf32>
    %c0_8 = arith.constant 0 : index
    %c0_9 = arith.constant 0 : index
    %32 = vector.load %arg5[%c0_8, %c0_9] : memref<4x128xf32, #tpu.memory_space<vmem>>, vector<4x128xf32>
    tpu.vector_store %arg5[%c0_8, %c0_9], %31 {strides = array<i32>} : memref<4x128xf32, #tpu.memory_space<vmem>>, vector<4x128xf32>,
    %c0_10 = arith.constant 0 : index
    %c0_11 = arith.constant 0 : index
    %33 = vector.load %arg4[%c0_10, %c0_11] : memref<4x128xf32, #tpu.memory_space<vmem>>, vector<4x128xf32>
    %34 = vector.extract_strided_slice %33 {offsets = [0, 16], sizes = [4, 112], strides = [1, 1]} : vector<4x128xf32> to vector<4x112xf32>
    %35 = vector.extract_strided_slice %33 {offsets = [0, 0], sizes = [4, 16], strides = [1, 1]} : vector<4x128xf32> to vector<4x16xf32>
    %36 = tpu.concatenate %34, %35 in 1 : vector<4x112xf32>, vector<4x16xf32> -> vector<4x128xf32>
    %37 = vector.extract_strided_slice %33 {offsets = [0, 112], sizes = [4, 16], strides = [1, 1]} : vector<4x128xf32> to vector<4x16xf32>
    %38 = vector.extract_strided_slice %33 {offsets = [0, 0], sizes = [4, 112], strides = [1, 1]} : vector<4x128xf32> to vector<4x112xf32>
    %39 = tpu.concatenate %37, %38 in 1 : vector<4x16xf32>, vector<4x112xf32> -> vector<4x128xf32>
    %40 = arith.select %20, %36, %39 : vector<4x128xi1>, vector<4x128xf32>
    %41 = arith.mulf %33, %0 : vector<4x128xf32>
    %42 = arith.mulf %40, %1 : vector<4x128xf32>
    %43 = arith.addf %41, %42 : vector<4x128xf32>
    %c0_12 = arith.constant 0 : index
    %c0_13 = arith.constant 0 : index
    %44 = vector.load %arg6[%c0_12, %c0_13] : memref<4x128xf32, #tpu.memory_space<vmem>>, vector<4x128xf32>
    tpu.vector_store %arg6[%c0_12, %c0_13], %43 {strides = array<i32>} : memref<4x128xf32, #tpu.memory_space<vmem>>, vector<4x128xf32>,
    return
  }
  func.func @transform_0(%arg0: i32) -> (i32, i32) {
    %c0_i32 = arith.constant 0 : i32
    %c0_i32_0 = arith.constant 0 : i32
    %c0_i32_1 = arith.constant 0 : i32
    return %c0_i32, %c0_i32_0 : i32, i32
  }
  func.func @transform_1(%arg0: i32) -> (i32, i32) {
    %c0_i32 = arith.constant 0 : i32
    %c0_i32_0 = arith.constant 0 : i32
    %c0_i32_1 = arith.constant 0 : i32
    return %c0_i32, %c0_i32_0 : i32, i32
  }
  func.func @transform_2(%arg0: i32) -> (i32, i32) {
    %c0_i32 = arith.constant 0 : i32
    %c0_i32_0 = arith.constant 0 : i32
    return %arg0, %c0_i32 : i32, i32
  }
  func.func @transform_3(%arg0: i32) -> (i32, i32) {
    %c0_i32 = arith.constant 0 : i32
    %c0_i32_0 = arith.constant 0 : i32
    return %arg0, %c0_i32 : i32, i32
  }
  func.func @transform_4(%arg0: i32) -> (i32, i32) {
    %c0_i32 = arith.constant 0 : i32
    %c0_i32_0 = arith.constant 0 : i32
    return %arg0, %c0_i32 : i32, i32
  }
  func.func @transform_5(%arg0: i32) -> (i32, i32) {
    %c0_i32 = arith.constant 0 : i32
    %c0_i32_0 = arith.constant 0 : i32
    return %arg0, %c0_i32 : i32, i32
  }
}

</mosaic_0001>

<llo_original>
// kernel: rotary_embedding.1
$region0: #{rotary_embedding.1}
  #allocation0 [shape = 'u32[]', space=smem, size = 0x4, offset = 0x4, fixed_abs, tag = 'smem constant byte address 0x4 - core index']
  #allocation1 [shape = 'u32[144,128]{1,0:T(1,128)}', space=vmem, size = 0x12000, scoped, tag = 'internal scratch']
  %s0 = inlined_call_operand.vmem [shape: f32[4,128], index: 0, kind: input, shape index: {}]
  %s1 = inlined_call_operand.vmem [shape: f32[4,128], index: 1, kind: input, shape index: {}]
  %s2 = inlined_call_operand.vmem [shape: f32[4,128], index: 2, kind: input, shape index: {}]
  %s3 = inlined_call_operand.vmem [shape: f32[4,128], index: 3, kind: input, shape index: {}]
  %s4 = inlined_call_operand.vmem [shape: f32[4,128], index: 4, kind: output, shape index: {0}]
  %s5 = inlined_call_operand.vmem [shape: f32[4,128], index: 5, kind: output, shape index: {1}]
  %6 = xla_tuple %s4, %s5
  %s7 = sld [smem:[#allocation0]]
  $region34: #{rotary_embedding.1} parent=0
    _
  %s9 = ssub.s32 1, %s7
  %s10 = scalar_select 0, %s9, %s7
  // Predicated region
  $region2: #{rotary_embedding.1} parent=0 // pred_check
    _
  $region3: #{rotary_embedding.1} parent=0 // pred_check_branch
    %12 = sbr.rel (0) target = $region5
  $region4: #{rotary_embedding.1} parent=0 // pred_region
    _
  $region5: #{rotary_embedding.1} parent=0 // pred_fallthru
    _
  // Predicated region
  $region6: #{rotary_embedding.1} parent=0 // pred_check
    _
  $region7: #{rotary_embedding.1} parent=0 // pred_check_branch
    %14 = sbr.rel (0) target = $region9
  $region8: #{rotary_embedding.1} parent=0 // pred_region
    _
  $region9: #{rotary_embedding.1} parent=0 // pred_fallthru
    _
  // Predicated region
  $region10: #{rotary_embedding.1} parent=0 // pred_check
    _
  $region11: #{rotary_embedding.1} parent=0 // pred_check_branch
    %16 = sbr.rel (0) target = $region13
  $region12: #{rotary_embedding.1} parent=0 // pred_region
    _
  $region13: #{rotary_embedding.1} parent=0 // pred_fallthru
    _
  // Predicated region
  $region14: #{rotary_embedding.1} parent=0 // pred_check
    _
  $region15: #{rotary_embedding.1} parent=0 // pred_check_branch
    %18 = sbr.rel (0) target = $region17
  $region16: #{rotary_embedding.1} parent=0 // pred_region
    _
  $region17: #{rotary_embedding.1} parent=0 // pred_fallthru
    _
  %v19 = vld [vmem:[%s0] sm:$0xf]
  %v20 = vld [vmem:[%s1] sm:$0xf]
  %v21 = vlaneseq
  %v22 = vand.u32 %v21, 127
  %vm23 = vcmp.lt.s32.totalorder %v22, 0
  %v24 = vsub.s32 0, %v22
  %v25 = vsel %vm23, %v24, %v22
  %v26 = vshrl.u32 %v25, 5
  %v27 = vand.u32 %v25, 31
  %v28 = vsub.s32 0, %v27
  %v29 = vsel %vm23, %v28, %v27
  %vm30 = vcmp.ne.s32.totalorder %v29, 0
  %vm31 = vcmp.lt.s32.totalorder %v29, 0
  %vm32 = vmand %vm31, %vm30
  %v33 = vadd.s32 %v29, 32
  %v34 = vsel %vm32, %v33, %v29
  %vm35 = vcmp.lt.s32.totalorder %v34, 16
  %v36 = vld [vmem:[%s2] sm:$0xf]
  %38 = vrot.lane.b32.xlu0 %v36, 112
  %v39 = vpop.permute.xlu0 %38
  %41 = vrot.lane.b32.xlu0 %v36, 16
  %v42 = vpop.permute.xlu0 %41
  %v44 = vsel %vm35, %v39, %v42
  %v45 = vmul.f32 %v36, %v19
  %v46 = vmul.f32 %v44, %v20
  %v47 = vadd.f32 %v45, %v46
  %48 = vst [vmem:[%s4] sm:$0xf] %v47
  %v49 = vld [vmem:[%s3] sm:$0xf]
  %51 = vrot.lane.b32.xlu0 %v49, 112
  %v52 = vpop.permute.xlu0 %51
  %54 = vrot.lane.b32.xlu0 %v49, 16
  %v55 = vpop.permute.xlu0 %54
  %v57 = vsel %vm35, %v52, %v55
  %v58 = vmul.f32 %v49, %v19
  %v59 = vmul.f32 %v57, %v20
  %v60 = vadd.f32 %v58, %v59
  %61 = vst [vmem:[%s5] sm:$0xf] %v60
  // Predicated region
  $region18: #{rotary_embedding.1} parent=0 // pred_check
    _
  $region19: #{rotary_embedding.1} parent=0 // pred_check_branch
    %63 = sbr.rel (0) target = $region21
  $region20: #{rotary_embedding.1} parent=0 // pred_region
    _
  $region21: #{rotary_embedding.1} parent=0 // pred_fallthru
    _
  // Predicated region
  $region22: #{rotary_embedding.1} parent=0 // pred_check
    _
  $region23: #{rotary_embedding.1} parent=0 // pred_check_branch
    %65 = sbr.rel (0) target = $region25
  $region24: #{rotary_embedding.1} parent=0 // pred_region
    _
  $region25: #{rotary_embedding.1} parent=0 // pred_fallthru
    _
  // Predicated region
  $region26: #{rotary_embedding.1} parent=0 // pred_check
    _
  $region27: #{rotary_embedding.1} parent=0 // pred_check_branch
    %67 = sbr.rel (0) target = $region29
  $region28: #{rotary_embedding.1} parent=0 // pred_region
    _
  $region29: #{rotary_embedding.1} parent=0 // pred_fallthru
    _
  // Predicated region
  $region30: #{rotary_embedding.1} parent=0 // pred_check
    _
  $region31: #{rotary_embedding.1} parent=0 // pred_check_branch
    %69 = sbr.rel (0) target = $region33
  $region32: #{rotary_embedding.1} parent=0 // pred_region
    _
  $region33: #{rotary_embedding.1} parent=0 // pred_fallthru
    _

</llo_original>
